<compile_context>
chip_gen: v7x
topology: tpu7x:2x2x1
jax: 0.10.0
libtpu: 0.0.40
codegen_flags: <defaults>
</compile_context>

<pallas_src>
import functools

import jax
import jax.numpy as jnp
from jax.experimental import pallas as pl
from jax.experimental.pallas import tpu as pltpu

LN_EPS = 1e-5


def _patch_merge_kernel(xe_ref, xo_ref, ge_ref, be_ref, go_ref, bo_ref,
                        we_ref, wo_ref, o_ref):
    # xe_ref/xo_ref: (r_tile, Wh, 2C)  even-h / odd-h halves of the merged tokens
    # ge/be/go/bo:   (1, 2C)  f32      LayerNorm affine, split by h-parity
    # we/wo:         (2C, 2C) bf16     reduction weight, split by h-parity
    # o_ref:         (r_tile, Wh, 2C)
    ge = ge_ref[...]
    be = be_ref[...]
    go = go_ref[...]
    bo = bo_ref[...]
    we = we_ref[...]
    wo = wo_ref[...]

    c2 = xe_ref.shape[-1]
    inv_4c = jnp.float32(1.0 / (2.0 * c2))  # full LayerNorm width is 4C = 2 * (2C)
    r_tile = xe_ref.shape[0]

    def body(i, carry):
        e = xe_ref[i].astype(jnp.float32)          # (Wh, 2C) = [x0 | x2]
        o = xo_ref[i].astype(jnp.float32)          # (Wh, 2C) = [x1 | x3]
        mean = (jnp.sum(e, axis=-1, keepdims=True) +
                jnp.sum(o, axis=-1, keepdims=True)) * inv_4c
        ce = e - mean
        co = o - mean
        var = (jnp.sum(ce * ce, axis=-1, keepdims=True) +
               jnp.sum(co * co, axis=-1, keepdims=True)) * inv_4c
        rstd = jax.lax.rsqrt(var + LN_EPS)
        ne = ce * rstd * ge + be
        no = co * rstd * go + bo
        acc = jnp.dot(ne.astype(we.dtype), we, preferred_element_type=jnp.float32)
        acc = acc + jnp.dot(no.astype(wo.dtype), wo, preferred_element_type=jnp.float32)
        o_ref[i] = acc.astype(o_ref.dtype)
        return carry

    jax.lax.fori_loop(0, r_tile, body, 0)


def _round_up(n, m):
    return ((n + m - 1) // m) * m


@functools.partial(jax.jit, static_argnames=("H", "W"))
def patch_merging(x, H, W, gamma, beta, w_reduction):
    """Forward pass of PatchMerging.

    x:            (B, H*W, C)
    gamma, beta:  (4*C,)       LayerNorm affine parameters
    w_reduction:  (2*C, 4*C)   torch nn.Linear weight (out_features, in_features)
    returns       (B, ceil(H/2)*ceil(W/2), 2*C)
    """
    B, L, C = x.shape
    assert L == H * W, "input feature has wrong size"

    xg = x.reshape(B, H, W, C)
    if (H % 2 == 1) or (W % 2 == 1):               # matches F.pad(x, (0,0,0,W%2,0,H%2))
        xg = jnp.pad(xg, ((0, 0), (0, H % 2), (0, W % 2), (0, 0)))
    Hp, Wp = xg.shape[1], xg.shape[2]
    Hh, Wh = Hp // 2, Wp // 2
    C2 = 2 * C                  # width of each parity half; also the output width
    R = B * Hh                  # merged-token rows

    # Free reshape (no data movement): row r = b*Hh + hh, parity p selects
    # spatial row 2*hh + p; token wh covers lanes [x_{w even} | x_{w odd}] = 2C.
    xr = xg.reshape(R, 2, Wh, C2)

    # Split LayerNorm affine + reduction weight by h-parity so the kernel never
    # builds the 4C concat ([x0, x1, x2, x3] -> even half [x0|x2], odd [x1|x3]).
    g4 = gamma.astype(jnp.float32).reshape(4, C)
    b4 = beta.astype(jnp.float32).reshape(4, C)
    g_e = jnp.concatenate([g4[0], g4[2]]).reshape(1, C2)
    g_o = jnp.concatenate([g4[1], g4[3]]).reshape(1, C2)
    b_e = jnp.concatenate([b4[0], b4[2]]).reshape(1, C2)
    b_o = jnp.concatenate([b4[1], b4[3]]).reshape(1, C2)

    wt = jnp.transpose(w_reduction, (1, 0)).reshape(4, C, C2)  # (4C,2C) -> (4,C,2C)
    w_e = jnp.concatenate([wt[0], wt[2]], axis=0).astype(jnp.bfloat16)   # (2C, 2C)
    w_o = jnp.concatenate([wt[1], wt[3]], axis=0).astype(jnp.bfloat16)   # (2C, 2C)

    # ---- tile sizing: ~1024 tokens per grid step, capped by a VMEM budget ----
    in_b = x.dtype.itemsize
    out_b = x.dtype.itemsize
    row_in = 2 * _round_up(Wh, 8) * _round_up(C2, 128) * in_b   # both parities
    row_out = _round_up(Wh, 8) * _round_up(C2, 128) * out_b
    row_bytes = 2 * (row_in + row_out)                          # double-buffered
    w_bytes = 2 * 2 * _round_up(C2, 8) * _round_up(C2, 128) * 2  # 2 weights x 2 bufs, bf16
    budget = max(4 * 1024 * 1024, 40 * 1024 * 1024 - w_bytes)   # v7x (64 MiB) safe
    max_rows = max(1, budget // row_bytes)
    target_rows = max(1, 1024 // max(Wh, 1))
    r_tile = int(min(R, max_rows, target_rows))
    grid = (pl.cdiv(R, r_tile),)

    out = pl.pallas_call(
        _patch_merge_kernel,
        out_shape=jax.ShapeDtypeStruct((R, Wh, C2), x.dtype),
        grid_spec=pltpu.PrefetchScalarGridSpec(
            num_scalar_prefetch=0,
            grid=grid,
            in_specs=[
                pl.BlockSpec((r_tile, None, Wh, C2), lambda i: (i, 0, 0, 0)),  # even h
                pl.BlockSpec((r_tile, None, Wh, C2), lambda i: (i, 1, 0, 0)),  # odd h
                pl.BlockSpec((1, C2), lambda i: (0, 0)),   # gamma_e
                pl.BlockSpec((1, C2), lambda i: (0, 0)),   # beta_e
                pl.BlockSpec((1, C2), lambda i: (0, 0)),   # gamma_o
                pl.BlockSpec((1, C2), lambda i: (0, 0)),   # beta_o
                pl.BlockSpec((C2, C2), lambda i: (0, 0)),  # w_e
                pl.BlockSpec((C2, C2), lambda i: (0, 0)),  # w_o
            ],
            out_specs=pl.BlockSpec((r_tile, Wh, C2), lambda i: (i, 0, 0)),
        ),
        compiler_params=pltpu.CompilerParams(
            dimension_semantics=("parallel",),
            vmem_limit_bytes=48 * 1024 * 1024,
        ),
    )(xr, xr, g_e, b_e, g_o, b_o, w_e, w_o)

    return out.reshape(B, Hh * Wh, C2)


def _reference(x, H, W, gamma, beta, w_reduction):
    """Pure-JAX f32 reference mirroring the PyTorch forward."""
    B, L, C = x.shape
    xg = x.reshape(B, H, W, C)
    if (H % 2 == 1) or (W % 2 == 1):
        xg = jnp.pad(xg, ((0, 0), (0, H % 2), (0, W % 2), (0, 0)))
    x0 = xg[:, 0::2, 0::2, :]
    x1 = xg[:, 1::2, 0::2, :]
    x2 = xg[:, 0::2, 1::2, :]
    x3 = xg[:, 1::2, 1::2, :]
    xc = jnp.concatenate([x0, x1, x2, x3], axis=-1)
    xc = xc.reshape(B, -1, 4 * C).astype(jnp.float32)
    mean = jnp.mean(xc, axis=-1, keepdims=True)
    var = jnp.mean((xc - mean) ** 2, axis=-1, keepdims=True)
    xn = (xc - mean) / jnp.sqrt(var + LN_EPS)
    xn = xn * gamma + beta
    return jnp.einsum("blk,ok->blo", xn, w_reduction.astype(jnp.float32))


if __name__ == "__main__":
    # small, lane-friendly shapes: dim C=32 -> 4C=128, 2C=64
    B, H, W, C = 2, 8, 8, 32
    key = jax.random.PRNGKey(0)
    kx, kw, kg, kb = jax.random.split(key, 4)

    x = jax.random.normal(kx, (B, H * W, C), dtype=jnp.float32)
    # deterministic synthetic parameters (shapes from PatchMerging.__init__)
    w_reduction = jax.random.normal(kw, (2 * C, 4 * C), dtype=jnp.float32) * 0.05
    gamma = 1.0 + 0.1 * jax.random.normal(kg, (4 * C,), dtype=jnp.float32)
    beta = 0.1 * jax.random.normal(kb, (4 * C,), dtype=jnp.float32)

    out = jax.block_until_ready(patch_merging(x, H, W, gamma, beta, w_reduction))
    ref = _reference(x, H, W, gamma, beta, w_reduction)
    assert out.shape == (B, (H // 2) * (W // 2), 2 * C), out.shape
    # bf16 MXU operands (f32 accumulate) -> bf16-level tolerance vs f32 reference
    err = float(jnp.max(jnp.abs(out.astype(jnp.float32) - ref)))
    assert err < 2e-2, f"mismatch vs reference: {err}"

    # odd spatial dims exercise the F.pad path
    Hodd, Wodd = 7, 7
    x_odd = jax.random.normal(kx, (B, Hodd * Wodd, C), dtype=jnp.float32)
    out_odd = jax.block_until_ready(
        patch_merging(x_odd, Hodd, Wodd, gamma, beta, w_reduction))
    ref_odd = _reference(x_odd, Hodd, Wodd, gamma, beta, w_reduction)
    assert out_odd.shape == (B, 16, 2 * C), out_odd.shape
    err_odd = float(jnp.max(jnp.abs(out_odd.astype(jnp.float32) - ref_odd)))
    assert err_odd < 2e-2, f"mismatch vs reference (odd pad): {err_odd}"

    print("KERNEL_OK")
</pallas_src>

<mosaic_0001>
module attributes {stable_mosaic.version = 11 : i64} {
  func.func @_patch_merge_kernel(%arg0: i32, %arg1: memref<8x1x4x64xf32, #tpu.memory_space<vmem>>, %arg2: memref<8x1x4x64xf32, #tpu.memory_space<vmem>>, %arg3: memref<1x64xf32, #tpu.memory_space<vmem>>, %arg4: memref<1x64xf32, #tpu.memory_space<vmem>>, %arg5: memref<1x64xf32, #tpu.memory_space<vmem>>, %arg6: memref<1x64xf32, #tpu.memory_space<vmem>>, %arg7: memref<64x64xbf16, #tpu.memory_space<vmem>>, %arg8: memref<64x64xbf16, #tpu.memory_space<vmem>>, %arg9: memref<8x4x64xf32, #tpu.memory_space<vmem>>) attributes {dimension_semantics = [#tpu.dimension_semantics<parallel>], iteration_bounds = array<i64: 1>, scalar_prefetch = 0 : i64, scratch_operands = 0 : i64, tpu.core_type = #tpu.core_type<tc>, window_params = [{transform_indices = @transform_0, window_bounds = array<i64: 8, 1, 4, 64>}, {transform_indices = @transform_1, window_bounds = array<i64: 8, 1, 4, 64>}, {pipeline_mode = #tpu.pipeline_mode<synchronous>, transform_indices = @transform_2, window_bounds = array<i64: 1, 64>}, {pipeline_mode = #tpu.pipeline_mode<synchronous>, transform_indices = @transform_3, window_bounds = array<i64: 1, 64>}, {pipeline_mode = #tpu.pipeline_mode<synchronous>, transform_indices = @transform_4, window_bounds = array<i64: 1, 64>}, {pipeline_mode = #tpu.pipeline_mode<synchronous>, transform_indices = @transform_5, window_bounds = array<i64: 1, 64>}, {pipeline_mode = #tpu.pipeline_mode<synchronous>, transform_indices = @transform_6, window_bounds = array<i64: 64, 64>}, {pipeline_mode = #tpu.pipeline_mode<synchronous>, transform_indices = @transform_7, window_bounds = array<i64: 64, 64>}, {transform_indices = @transform_8, window_bounds = array<i64: 8, 4, 64>}]} {
    %c0 = arith.constant 0 : index
    %c0_0 = arith.constant 0 : index
    %0 = vector.load %arg3[%c0, %c0_0] : memref<1x64xf32, #tpu.memory_space<vmem>>, vector<1x64xf32>
    %c0_1 = arith.constant 0 : index
    %c0_2 = arith.constant 0 : index
    %1 = vector.load %arg4[%c0_1, %c0_2] : memref<1x64xf32, #tpu.memory_space<vmem>>, vector<1x64xf32>
    %c0_3 = arith.constant 0 : index
    %c0_4 = arith.constant 0 : index
    %2 = vector.load %arg5[%c0_3, %c0_4] : memref<1x64xf32, #tpu.memory_space<vmem>>, vector<1x64xf32>
    %c0_5 = arith.constant 0 : index
    %c0_6 = arith.constant 0 : index
    %3 = vector.load %arg6[%c0_5, %c0_6] : memref<1x64xf32, #tpu.memory_space<vmem>>, vector<1x64xf32>
    %c0_7 = arith.constant 0 : index
    %c0_8 = arith.constant 0 : index
    %4 = vector.load %arg7[%c0_7, %c0_8] : memref<64x64xbf16, #tpu.memory_space<vmem>>, vector<64x64xbf16>
    %c0_9 = arith.constant 0 : index
    %c0_10 = arith.constant 0 : index
    %5 = vector.load %arg8[%c0_9, %c0_10] : memref<64x64xbf16, #tpu.memory_space<vmem>>, vector<64x64xbf16>
    %cst = arith.constant 7.812500e-03 : f32
    %c0_i32 = arith.constant 0 : i32
    %c8_i32 = arith.constant 8 : i32
    %6 = arith.addi %c0_i32, %c8_i32 : i32
    %c1_i32 = arith.constant 1 : i32
    scf.for %arg10 = %c0_i32 to %6 step %c1_i32  : i32 {
      %7 = arith.index_cast %arg10 : i32 to index
      %c0_12 = arith.constant 0 : index
      %c0_13 = arith.constant 0 : index
      %c0_14 = arith.constant 0 : index
      %8 = vector.load %arg1[%7, %c0_12, %c0_13, %c0_14] : memref<8x1x4x64xf32, #tpu.memory_space<vmem>>, vector<1x1x4x64xf32>
      %9 = vector.shape_cast %8 : vector<1x1x4x64xf32> to vector<4x64xf32>
      %10 = arith.index_cast %arg10 : i32 to index
      %c0_15 = arith.constant 0 : index
      %c0_16 = arith.constant 0 : index
      %c0_17 = arith.constant 0 : index
      %11 = vector.load %arg2[%10, %c0_15, %c0_16, %c0_17] : memref<8x1x4x64xf32, #tpu.memory_space<vmem>>, vector<1x1x4x64xf32>
      %12 = vector.shape_cast %11 : vector<1x1x4x64xf32> to vector<4x64xf32>
      %cst_18 = arith.constant dense<0.000000e+00> : vector<4xf32>
      %13 = vector.multi_reduction <add>, %9, %cst_18 [1] : vector<4x64xf32> to vector<4xf32>
      %14 = vector.shape_cast %13 : vector<4xf32> to vector<4x1xf32>
      %cst_19 = arith.constant dense<0.000000e+00> : vector<4xf32>
      %15 = vector.multi_reduction <add>, %12, %cst_19 [1] : vector<4x64xf32> to vector<4xf32>
      %16 = vector.shape_cast %15 : vector<4xf32> to vector<4x1xf32>
      %17 = arith.addf %14, %16 : vector<4x1xf32>
      %18 = vector.broadcast %cst : f32 to vector<4x1xf32>
      %19 = arith.mulf %17, %18 : vector<4x1xf32>
      %20 = vector.broadcast %19 : vector<4x1xf32> to vector<4x64xf32>
      %21 = arith.subf %9, %20 : vector<4x64xf32>
      %22 = vector.broadcast %19 : vector<4x1xf32> to vector<4x64xf32>
      %23 = arith.subf %12, %22 : vector<4x64xf32>
      %24 = arith.mulf %21, %21 : vector<4x64xf32>
      %cst_20 = arith.constant dense<0.000000e+00> : vector<4xf32>
      %25 = vector.multi_reduction <add>, %24, %cst_20 [1] : vector<4x64xf32> to vector<4xf32>
      %26 = vector.shape_cast %25 : vector<4xf32> to vector<4x1xf32>
      %27 = arith.mulf %23, %23 : vector<4x64xf32>
      %cst_21 = arith.constant dense<0.000000e+00> : vector<4xf32>
      %28 = vector.multi_reduction <add>, %27, %cst_21 [1] : vector<4x64xf32> to vector<4xf32>
      %29 = vector.shape_cast %28 : vector<4xf32> to vector<4x1xf32>
      %30 = arith.addf %26, %29 : vector<4x1xf32>
      %31 = vector.broadcast %cst : f32 to vector<4x1xf32>
      %32 = arith.mulf %30, %31 : vector<4x1xf32>
      %cst_22 = arith.constant 9.99999974E-6 : f32
      %33 = vector.broadcast %cst_22 : f32 to vector<4x1xf32>
      %34 = arith.addf %32, %33 : vector<4x1xf32>
      %35 = math.rsqrt %34 : vector<4x1xf32>
      %36 = vector.broadcast %35 : vector<4x1xf32> to vector<4x64xf32>
      %37 = arith.mulf %21, %36 : vector<4x64xf32>
      %38 = vector.broadcast %0 : vector<1x64xf32> to vector<4x64xf32>
      %39 = arith.mulf %37, %38 : vector<4x64xf32>
      %40 = vector.broadcast %1 : vector<1x64xf32> to vector<4x64xf32>
      %41 = arith.addf %39, %40 : vector<4x64xf32>
      %42 = vector.broadcast %35 : vector<4x1xf32> to vector<4x64xf32>
      %43 = arith.mulf %23, %42 : vector<4x64xf32>
      %44 = vector.broadcast %2 : vector<1x64xf32> to vector<4x64xf32>
      %45 = arith.mulf %43, %44 : vector<4x64xf32>
      %46 = vector.broadcast %3 : vector<1x64xf32> to vector<4x64xf32>
      %47 = arith.addf %45, %46 : vector<4x64xf32>
      %48 = arith.truncf %41 : vector<4x64xf32> to vector<4x64xbf16>
      %cst_23 = arith.constant dense<0.000000e+00> : vector<4x64xf32>
      %49 = tpu.matmul %48, %4, %cst_23 {dimension_numbers = #tpu.dot_dimension_numbers<[1], [0], [0], [1], [0, 0, 1, 1], [], []>} : vector<4x64xbf16>, vector<64x64xbf16>, vector<4x64xf32> -> vector<4x64xf32>
      %50 = arith.truncf %47 : vector<4x64xf32> to vector<4x64xbf16>
      %cst_24 = arith.constant dense<0.000000e+00> : vector<4x64xf32>
      %51 = tpu.matmul %50, %5, %cst_24 {dimension_numbers = #tpu.dot_dimension_numbers<[1], [0], [0], [1], [0, 0, 1, 1], [], []>} : vector<4x64xbf16>, vector<64x64xbf16>, vector<4x64xf32> -> vector<4x64xf32>
      %52 = arith.addf %49, %51 : vector<4x64xf32>
      %53 = arith.index_cast %arg10 : i32 to index
      %c0_25 = arith.constant 0 : index
      %c0_26 = arith.constant 0 : index
      %54 = vector.load %arg9[%53, %c0_25, %c0_26] : memref<8x4x64xf32, #tpu.memory_space<vmem>>, vector<1x4x64xf32>
      %55 = vector.shape_cast %54 : vector<1x4x64xf32> to vector<4x64xf32>
      %56 = vector.shape_cast %52 : vector<4x64xf32> to vector<1x4x64xf32>
      tpu.vector_store %arg9[%53, %c0_25, %c0_26], %56 {strides = array<i32>} : memref<8x4x64xf32, #tpu.memory_space<vmem>>, vector<1x4x64xf32>,
    }
    %c8_i32_11 = arith.constant 8 : i32
    return
  }
  func.func @transform_0(%arg0: i32) -> (i32, i32, i32, i32) {
    %c0_i32 = arith.constant 0 : i32
    %c0_i32_0 = arith.constant 0 : i32
    %c0_i32_1 = arith.constant 0 : i32
    %c0_i32_2 = arith.constant 0 : i32
    return %arg0, %c0_i32, %c0_i32_0, %c0_i32_1 : i32, i32, i32, i32
  }
  func.func @transform_1(%arg0: i32) -> (i32, i32, i32, i32) {
    %c1_i32 = arith.constant 1 : i32
    %c0_i32 = arith.constant 0 : i32
    %c0_i32_0 = arith.constant 0 : i32
    %c0_i32_1 = arith.constant 0 : i32
    return %arg0, %c1_i32, %c0_i32, %c0_i32_0 : i32, i32, i32, i32
  }
  func.func @transform_2(%arg0: i32) -> (i32, i32) {
    %c0_i32 = arith.constant 0 : i32
    %c0_i32_0 = arith.constant 0 : i32
    %c0_i32_1 = arith.constant 0 : i32
    return %c0_i32, %c0_i32_0 : i32, i32
  }
  func.func @transform_3(%arg0: i32) -> (i32, i32) {
    %c0_i32 = arith.constant 0 : i32
    %c0_i32_0 = arith.constant 0 : i32
    %c0_i32_1 = arith.constant 0 : i32
    return %c0_i32, %c0_i32_0 : i32, i32
  }
  func.func @transform_4(%arg0: i32) -> (i32, i32) {
    %c0_i32 = arith.constant 0 : i32
    %c0_i32_0 = arith.constant 0 : i32
    %c0_i32_1 = arith.constant 0 : i32
    return %c0_i32, %c0_i32_0 : i32, i32
  }
  func.func @transform_5(%arg0: i32) -> (i32, i32) {
    %c0_i32 = arith.constant 0 : i32
    %c0_i32_0 = arith.constant 0 : i32
    %c0_i32_1 = arith.constant 0 : i32
    return %c0_i32, %c0_i32_0 : i32, i32
  }
  func.func @transform_6(%arg0: i32) -> (i32, i32) {
    %c0_i32 = arith.constant 0 : i32
    %c0_i32_0 = arith.constant 0 : i32
    %c0_i32_1 = arith.constant 0 : i32
    return %c0_i32, %c0_i32_0 : i32, i32
  }
  func.func @transform_7(%arg0: i32) -> (i32, i32) {
    %c0_i32 = arith.constant 0 : i32
    %c0_i32_0 = arith.constant 0 : i32
    %c0_i32_1 = arith.constant 0 : i32
    return %c0_i32, %c0_i32_0 : i32, i32
  }
  func.func @transform_8(%arg0: i32) -> (i32, i32, i32) {
    %c0_i32 = arith.constant 0 : i32
    %c0_i32_0 = arith.constant 0 : i32
    %c0_i32_1 = arith.constant 0 : i32
    return %arg0, %c0_i32, %c0_i32_0 : i32, i32, i32
  }
}

</mosaic_0001>

<llo_original>
// kernel: patch_merging.1
$region0: #{patch_merging.1}
  #allocation0 [shape = 'u32[]', space=smem, size = 0x4, offset = 0x4, fixed_abs, tag = 'smem constant byte address 0x4 - core index']
  #allocation1 [shape = 'u32[144,128]{1,0:T(1,128)}', space=vmem, size = 0x12000, scoped, tag = 'internal scratch']
  %s0 = inlined_call_operand.vmem [shape: f32[8,2,4,64], index: 0, kind: input, shape index: {}, may-alias: {0,1}]
  %s1 = inlined_call_operand.vmem [shape: f32[8,2,4,64], index: 1, kind: input, shape index: {}, may-alias: {0,1}]
  %s2 = inlined_call_operand.vmem [shape: f32[1,64], index: 2, kind: input, shape index: {}]
  %s3 = inlined_call_operand.vmem [shape: f32[1,64], index: 3, kind: input, shape index: {}]
  %s4 = inlined_call_operand.vmem [shape: f32[1,64], index: 4, kind: input, shape index: {}]
  %s5 = inlined_call_operand.vmem [shape: f32[1,64], index: 5, kind: input, shape index: {}]
  %s6 = inlined_call_operand.vmem [shape: bf16[64,64], index: 6, kind: input, shape index: {}]
  %s7 = inlined_call_operand.vmem [shape: bf16[64,64], index: 7, kind: input, shape index: {}]
  %s8 = inlined_call_operand.hbm [shape: f32[8,4,64], index: 8, kind: output, shape index: {}]
  %s9 = sld [smem:[#allocation0]]
  $region131: #{patch_merging.1} parent=0
    _
  %s11 = ssub.s32 1, %s9
  %s12 = scalar_select 0, %s11, %s9
  $region1: #{patch_merging.1} parent=0
    #allocation2 [shape = 'u8[16384]{0}', space=vmem, size = 0x4000, scoped, tag = 'input window, operand 0, single buffered']
    #allocation3 [shape = 'u8[16384]{0}', space=vmem, size = 0x4000, scoped, tag = 'input window, operand 1, single buffered']
    #allocation4 [shape = 'u8[16384]{0}', space=vmem, size = 0x4000, scoped, tag = 'output window, operand 0, single buffered']
    #allocation5 [shape = 's32[1]{0}', space=sflag, size = 0x4, scoped, tag = 'scoped memory for patch_merging.1']
    %13 = vsyncpa [#allocation5], 0
    // Predicated region
    $region2: #{patch_merging.1} parent=1 // pred_check
      _
    $region3: #{patch_merging.1} parent=1 // pred_check_branch
      %15 = sbr.rel (0) target = $region5
    $region4: #{patch_merging.1} parent=1 // pred_region
      // Predicated region
      $region6: #{patch_merging.1} parent=4 // pred_check
        _
      $region7: #{patch_merging.1} parent=4 // pred_check_branch
        %17 = sbr.rel (0) target = $region9
      $region8: #{patch_merging.1} parent=4 // pred_region
        // Predicated region
        $region10: #{patch_merging.1} parent=8 // pred_check
          _
        $region11: #{patch_merging.1} parent=8 // pred_check_branch
          %19 = sbr.rel target = $region13
        $region12: #{patch_merging.1} parent=8 // pred_region
          // Predicated region
          $region25: #{patch_merging.1} parent=12 // pred_check
            _
          $region26: #{patch_merging.1} parent=12 // pred_check_branch
            %48 = sbr.rel (0) target = $region28
          $region27: #{patch_merging.1} parent=12 // pred_region
            loop: start=0, step=1, limit=1
            $region29: #{patch_merging.1} parent=27 // loop_pre_header
              _
            $region30: #{patch_merging.1} parent=27 // loop_header
              %s50 = sphi 0, %s54
              %p51 = scmp.ge.s32.totalorder %s50, 1
              %s55 = sphi %s0, %s0
              %s56 = sphi [#allocation2], [#allocation2]
            $region31: #{patch_merging.1} parent=27 // loop_header_branch
              %53 = sbr.rel (%p51) target = $region35
            $region32: #{patch_merging.1} parent=27 // loop_body
              _
            $region33: #{patch_merging.1} parent=27 // loop_footer
              %s54 = sadd.s32 1, %s50
            $region34: #{patch_merging.1} parent=27 // loop_footer_branch
              %49 = sbr.rel target = $region30
            $region35: #{patch_merging.1} parent=27 // loop_exit
              _
            loop: start=0, step=1, limit=1
            $region36: #{patch_merging.1} parent=27 // loop_pre_header
              _
            $region37: #{patch_merging.1} parent=27 // loop_header
              %s59 = sphi 0, %s63
              %p60 = scmp.ge.s32.totalorder %s59, 1
              %s64 = sphi %s0, %s0
              %s65 = sphi [#allocation2], [#allocation2]
            $region38: #{patch_merging.1} parent=27 // loop_header_branch
              %62 = sbr.rel (%p60) target = $region42
            $region39: #{patch_merging.1} parent=27 // loop_body
              %v66 = vld [vmem:[%s64] sm:$0xf]
              %67 = vst [vmem:[%s65] sm:$0xf] %v66
              %v68 = vld [vmem:[%s64 + $0x8] sm:$0xf]
              %69 = vst [vmem:[%s65 + $0x4] sm:$0xf] %v68
              %v70 = vld [vmem:[%s64 + $0x10] sm:$0xf]
              %71 = vst [vmem:[%s65 + $0x8] sm:$0xf] %v70
              %v72 = vld [vmem:[%s64 + $0x18] sm:$0xf]
              %73 = vst [vmem:[%s65 + $0xc] sm:$0xf] %v72
              %v74 = vld [vmem:[%s64 + $0x20] sm:$0xf]
              %75 = vst [vmem:[%s65 + $0x10] sm:$0xf] %v74
              %v76 = vld [vmem:[%s64 + $0x28] sm:$0xf]
              %77 = vst [vmem:[%s65 + $0x14] sm:$0xf] %v76
              %v78 = vld [vmem:[%s64 + $0x30] sm:$0xf]
              %79 = vst [vmem:[%s65 + $0x18] sm:$0xf] %v78
              %v80 = vld [vmem:[%s64 + $0x38] sm:$0xf]
              %81 = vst [vmem:[%s65 + $0x1c] sm:$0xf] %v80
            $region40: #{patch_merging.1} parent=27 // loop_footer
              %s63 = sadd.s32 1, %s59
            $region41: #{patch_merging.1} parent=27 // loop_footer_branch
              %58 = sbr.rel target = $region37
            $region42: #{patch_merging.1} parent=27 // loop_exit
              _
          $region28: #{patch_merging.1} parent=12 // pred_fallthru
            _
        $region13: #{patch_merging.1} parent=8 // pred_fallthru
          _
        // Predicated region
        $region14: #{patch_merging.1} parent=8 // pred_check
          _
        $region15: #{patch_merging.1} parent=8 // pred_check_branch
          %21 = sbr.rel (0) target = $region17
        $region16: #{patch_merging.1} parent=8 // pred_region
          loop: start=0, step=1, limit=1
          $region18: #{patch_merging.1} parent=16 // loop_pre_header
            _
          $region19: #{patch_merging.1} parent=16 // loop_header
            %s24 = sphi 0, %s28
            %p25 = scmp.ge.s32.totalorder %s24, 1
            %s29 = sphi %s0, %s0
            %s30 = sphi [#allocation2], [#allocation2]
          $region20: #{patch_merging.1} parent=16 // loop_header_branch
            %27 = sbr.rel (%p25) target = $region24
          $region21: #{patch_merging.1} parent=16 // loop_body
            %v31 = vld [vmem:[%s29] sm:$0xf]
            %32 = vst [vmem:[%s30] sm:$0xf] %v31
            %v33 = vld [vmem:[%s29 + $0x8] sm:$0xf]
            %34 = vst [vmem:[%s30 + $0x4] sm:$0xf] %v33
            %v35 = vld [vmem:[%s29 + $0x10] sm:$0xf]
            %36 = vst [vmem:[%s30 + $0x8] sm:$0xf] %v35
            %v37 = vld [vmem:[%s29 + $0x18] sm:$0xf]
            %38 = vst [vmem:[%s30 + $0xc] sm:$0xf] %v37
            %v39 = vld [vmem:[%s29 + $0x20] sm:$0xf]
            %40 = vst [vmem:[%s30 + $0x10] sm:$0xf] %v39
            %v41 = vld [vmem:[%s29 + $0x28] sm:$0xf]
            %42 = vst [vmem:[%s30 + $0x14] sm:$0xf] %v41
            %v43 = vld [vmem:[%s29 + $0x30] sm:$0xf]
            %44 = vst [vmem:[%s30 + $0x18] sm:$0xf] %v43
            %v45 = vld [vmem:[%s29 + $0x38] sm:$0xf]
            %46 = vst [vmem:[%s30 + $0x1c] sm:$0xf] %v45
          $region22: #{patch_merging.1} parent=16 // loop_footer
            %s28 = sadd.s32 1, %s24
          $region23: #{patch_merging.1} parent=16 // loop_footer_branch
            %23 = sbr.rel target = $region19
          $region24: #{patch_merging.1} parent=16 // loop_exit
            _
        $region17: #{patch_merging.1} parent=8 // pred_fallthru
          _
      $region9: #{patch_merging.1} parent=4 // pred_fallthru
        _
      %82 = vnop
    $region5: #{patch_merging.1} parent=1 // pred_fallthru
      _
    // Predicated region
    $region43: #{patch_merging.1} parent=1 // pred_check
      _
    $region44: #{patch_merging.1} parent=1 // pred_check_branch
      %84 = sbr.rel (0) target = $region46
    $region45: #{patch_merging.1} parent=1 // pred_region
      %s85 = scalar_lea.vmem %s1, 4
      // Predicated region
      $region47: #{patch_merging.1} parent=45 // pred_check
        _
      $region48: #{patch_merging.1} parent=45 // pred_check_branch
        %87 = sbr.rel (0) target = $region50
      $region49: #{patch_merging.1} parent=45 // pred_region
        // Predicated region
        $region51: #{patch_merging.1} parent=49 // pred_check
          _
        $region52: #{patch_merging.1} parent=49 // pred_check_branch
          %89 = sbr.rel target = $region54
        $region53: #{patch_merging.1} parent=49 // pred_region
          // Predicated region
          $region66: #{patch_merging.1} parent=53 // pred_check
            _
          $region67: #{patch_merging.1} parent=53 // pred_check_branch
            %118 = sbr.rel (0) target = $region69
          $region68: #{patch_merging.1} parent=53 // pred_region
            loop: start=0, step=1, limit=1
            $region70: #{patch_merging.1} parent=68 // loop_pre_header
              _
            $region71: #{patch_merging.1} parent=68 // loop_header
              %s120 = sphi 0, %s124
              %p121 = scmp.ge.s32.totalorder %s120, 1
              %s125 = sphi %s85, %s85
              %s126 = sphi [#allocation3], [#allocation3]
            $region72: #{patch_merging.1} parent=68 // loop_header_branch
              %123 = sbr.rel (%p121) target = $region76
            $region73: #{patch_merging.1} parent=68 // loop_body
              _
            $region74: #{patch_merging.1} parent=68 // loop_footer
              %s124 = sadd.s32 1, %s120
            $region75: #{patch_merging.1} parent=68 // loop_footer_branch
              %119 = sbr.rel target = $region71
            $region76: #{patch_merging.1} parent=68 // loop_exit
              _
            loop: start=0, step=1, limit=1
            $region77: #{patch_merging.1} parent=68 // loop_pre_header
              _
            $region78: #{patch_merging.1} parent=68 // loop_header
              %s129 = sphi 0, %s133
              %p130 = scmp.ge.s32.totalorder %s129, 1
              %s134 = sphi %s85, %s85
              %s135 = sphi [#allocation3], [#allocation3]
            $region79: #{patch_merging.1} parent=68 // loop_header_branch
              %132 = sbr.rel (%p130) target = $region83
            $region80: #{patch_merging.1} parent=68 // loop_body
              %v136 = vld [vmem:[%s134] sm:$0xf]
              %137 = vst [vmem:[%s135] sm:$0xf] %v136
              %v138 = vld [vmem:[%s134 + $0x8] sm:$0xf]
              %139 = vst [vmem:[%s135 + $0x4] sm:$0xf] %v138
              %v140 = vld [vmem:[%s134 + $0x10] sm:$0xf]
              %141 = vst [vmem:[%s135 + $0x8] sm:$0xf] %v140
              %v142 = vld [vmem:[%s134 + $0x18] sm:$0xf]
              %143 = vst [vmem:[%s135 + $0xc] sm:$0xf] %v142
              %v144 = vld [vmem:[%s134 + $0x20] sm:$0xf]
              %145 = vst [vmem:[%s135 + $0x10] sm:$0xf] %v144
              %v146 = vld [vmem:[%s134 + $0x28] sm:$0xf]
              %147 = vst [vmem:[%s135 + $0x14] sm:$0xf] %v146
              %v148 = vld [vmem:[%s134 + $0x30] sm:$0xf]
              %149 = vst [vmem:[%s135 + $0x18] sm:$0xf] %v148
              %v150 = vld [vmem:[%s134 + $0x38] sm:$0xf]
              %151 = vst [vmem:[%s135 + $0x1c] sm:$0xf] %v150
            $region81: #{patch_merging.1} parent=68 // loop_footer
              %s133 = sadd.s32 1, %s129
            $region82: #{patch_merging.1} parent=68 // loop_footer_branch
              %128 = sbr.rel target = $region78
            $region83: #{patch_merging.1} parent=68 // loop_exit
              _
          $region69: #{patch_merging.1} parent=53 // pred_fallthru
            _
        $region54: #{patch_merging.1} parent=49 // pred_fallthru
          _
        // Predicated region
        $region55: #{patch_merging.1} parent=49 // pred_check
          _
        $region56: #{patch_merging.1} parent=49 // pred_check_branch
          %91 = sbr.rel (0) target = $region58
        $region57: #{patch_merging.1} parent=49 // pred_region
          loop: start=0, step=1, limit=1
          $region59: #{patch_merging.1} parent=57 // loop_pre_header
            _
          $region60: #{patch_merging.1} parent=57 // loop_header
            %s94 = sphi 0, %s98
            %p95 = scmp.ge.s32.totalorder %s94, 1
            %s99 = sphi %s85, %s85
            %s100 = sphi [#allocation3], [#allocation3]
          $region61: #{patch_merging.1} parent=57 // loop_header_branch
            %97 = sbr.rel (%p95) target = $region65
          $region62: #{patch_merging.1} parent=57 // loop_body
            %v101 = vld [vmem:[%s99] sm:$0xf]
            %102 = vst [vmem:[%s100] sm:$0xf] %v101
            %v103 = vld [vmem:[%s99 + $0x8] sm:$0xf]
            %104 = vst [vmem:[%s100 + $0x4] sm:$0xf] %v103
            %v105 = vld [vmem:[%s99 + $0x10] sm:$0xf]
            %106 = vst [vmem:[%s100 + $0x8] sm:$0xf] %v105
            %v107 = vld [vmem:[%s99 + $0x18] sm:$0xf]
            %108 = vst [vmem:[%s100 + $0xc] sm:$0xf] %v107
            %v109 = vld [vmem:[%s99 + $0x20] sm:$0xf]
            %110 = vst [vmem:[%s100 + $0x10] sm:$0xf] %v109
            %v111 = vld [vmem:[%s99 + $0x28] sm:$0xf]
            %112 = vst [vmem:[%s100 + $0x14] sm:$0xf] %v111
            %v113 = vld [vmem:[%s99 + $0x30] sm:$0xf]
            %114 = vst [vmem:[%s100 + $0x18] sm:$0xf] %v113
            %v115 = vld [vmem:[%s99 + $0x38] sm:$0xf]
            %116 = vst [vmem:[%s100 + $0x1c] sm:$0xf] %v115
          $region63: #{patch_merging.1} parent=57 // loop_footer
            %s98 = sadd.s32 1, %s94
          $region64: #{patch_merging.1} parent=57 // loop_footer_branch
            %93 = sbr.rel target = $region60
          $region65: #{patch_merging.1} parent=57 // loop_exit
            _
        $region58: #{patch_merging.1} parent=49 // pred_fallthru
          _
      $region50: #{patch_merging.1} parent=45 // pred_fallthru
        _
      %152 = vnop
    $region46: #{patch_merging.1} parent=1 // pred_fallthru
      _
    // Predicated region
    $region84: #{patch_merging.1} parent=1 // pred_check
      _
    $region85: #{patch_merging.1} parent=1 // pred_check_branch
      %154 = sbr.rel (0) target = $region87
    $region86: #{patch_merging.1} parent=1 // pred_region
      _
    $region87: #{patch_merging.1} parent=1 // pred_fallthru
      _
    // Predicated region
    $region88: #{patch_merging.1} parent=1 // pred_check
      _
    $region89: #{patch_merging.1} parent=1 // pred_check_branch
      %156 = sbr.rel (0) target = $region91
    $region90: #{patch_merging.1} parent=1 // pred_region
      _
    $region91: #{patch_merging.1} parent=1 // pred_fallthru
      _
    // Predicated region
    $region92: #{patch_merging.1} parent=1 // pred_check
      _
    $region93: #{patch_merging.1} parent=1 // pred_check_branch
      %158 = sbr.rel (0) target = $region95
    $region94: #{patch_merging.1} parent=1 // pred_region
      _
    $region95: #{patch_merging.1} parent=1 // pred_fallthru
      _
    // Predicated region
    $region96: #{patch_merging.1} parent=1 // pred_check
      _
    $region97: #{patch_merging.1} parent=1 // pred_check_branch
      %160 = sbr.rel (0) target = $region99
    $region98: #{patch_merging.1} parent=1 // pred_region
      _
    $region99: #{patch_merging.1} parent=1 // pred_fallthru
      _
    // Predicated region
    $region100: #{patch_merging.1} parent=1 // pred_check
      _
    $region101: #{patch_merging.1} parent=1 // pred_check_branch
      %162 = sbr.rel (0) target = $region103
    $region102: #{patch_merging.1} parent=1 // pred_region
      _
    $region103: #{patch_merging.1} parent=1 // pred_fallthru
      _
    // Predicated region
    $region104: #{patch_merging.1} parent=1 // pred_check
      _
    $region105: #{patch_merging.1} parent=1 // pred_check_branch
      %164 = sbr.rel (0) target = $region107
    $region106: #{patch_merging.1} parent=1 // pred_region
      _
    $region107: #{patch_merging.1} parent=1 // pred_fallthru
      _
    // Predicated region
    $region108: #{patch_merging.1} parent=1 // pred_check
      _
    $region109: #{patch_merging.1} parent=1 // pred_check_branch
      %166 = sbr.rel (0) target = $region111
    $region110: #{patch_merging.1} parent=1 // pred_region
      _
    $region111: #{patch_merging.1} parent=1 // pred_fallthru
      _
    // Predicated region
    $region112: #{patch_merging.1} parent=1 // pred_check
      _
    $region113: #{patch_merging.1} parent=1 // pred_check_branch
      %168 = sbr.rel (0) target = $region115
    $region114: #{patch_merging.1} parent=1 // pred_region
      _
    $region115: #{patch_merging.1} parent=1 // pred_fallthru
      _
    %v170 = vld [vmem:[%s2] sm:$0x1]
    %v171 = vld [vmem:[%s3] sm:$0x1]
    %v172 = vld [vmem:[%s4] sm:$0x1]
    %v173 = vld [vmem:[%s5] sm:$0x1]
    %v174 = vld [vmem:[%s6] sm:$0xf]
    %v175 = vld [vmem:[%s6 + $0x4] sm:$0xf]
    %v176 = vld [vmem:[%s6 + $0x8] sm:$0xf]
    %v177 = vld [vmem:[%s6 + $0xc] sm:$0xf]
    %v178 = vld [vmem:[%s6 + $0x10] sm:$0xf]
    %v179 = vld [vmem:[%s6 + $0x14] sm:$0xf]
    %v180 = vld [vmem:[%s6 + $0x18] sm:$0xf]
    %v181 = vld [vmem:[%s6 + $0x1c] sm:$0xf]
    %v182 = vld [vmem:[%s7] sm:$0xf]
    %v183 = vld [vmem:[%s7 + $0x4] sm:$0xf]
    %v184 = vld [vmem:[%s7 + $0x8] sm:$0xf]
    %v185 = vld [vmem:[%s7 + $0xc] sm:$0xf]
    %v186 = vld [vmem:[%s7 + $0x10] sm:$0xf]
    %v187 = vld [vmem:[%s7 + $0x14] sm:$0xf]
    %v188 = vld [vmem:[%s7 + $0x18] sm:$0xf]
    %v189 = vld [vmem:[%s7 + $0x1c] sm:$0xf]
    loop: start=0, step=1, limit=8
    $region116: #{patch_merging.1} parent=1 // loop_pre_header
      _
    $region117: #{patch_merging.1} parent=1 // loop_header
      %s191 = sphi 0, %s195
      %p192 = scmp.ge.s32.totalorder %s191, 8
    $region118: #{patch_merging.1} parent=1 // loop_header_branch
      %194 = sbr.rel (%p192) target = $region122
    $region119: #{patch_merging.1} parent=1 // loop_body
      %s196 = smul.u32 %s191, 4
      %s197 = scalar_lea.vmem [#allocation2], %s196
      %v198 = vld [vmem:[%s197] sm:$0xf]
      %s199 = scalar_lea.vmem [#allocation3], %s196
      %v200 = vld [vmem:[%s199] sm:$0xf]
      %vm201 = vcmask 519168
      %v202 = vsel %vm201, %v198, 0.0
      %203 = vadd.xlane.f32.xlu0 %v202
      %v204 = vpop.xlane.xlu0 %203
      %v205 = vsel %vm201, %v200, 0.0
      %206 = vadd.xlane.f32.xlu0 %v205
      %v207 = vpop.xlane.xlu0 %206
      %v208 = vadd.f32 %v204, %v207
      %v209 = vmul.f32 %v208, 0.0078125
      %v210 = vsub.f32 %v198, %v209
      %v211 = vsub.f32 %v200, %v209
      %v212 = vmul.f32 %v210, %v210
      %v213 = vsel %vm201, %v212, 0.0
      %214 = vadd.xlane.f32.xlu0 %v213
      %v215 = vpop.xlane.xlu0 %214
      %v216 = vmul.f32 %v211, %v211
      %v217 = vsel %vm201, %v216, 0.0
      %218 = vadd.xlane.f32.xlu0 %v217
      %v219 = vpop.xlane.xlu0 %218
      %v220 = vadd.f32 %v215, %v219
      %v221 = vmul.f32 %v220, 0.0078125
      %v222 = vadd.f32 %v221, 1e-05
      %v223 = vrsqrt.pop %v222
      %v224 = vmul.f32 %v210, %v223
      %v226 = vlaneseq
      %v227 = vshrl.u32 %v226, 7
      %v228 = vsub.s32 0, %v227
      %v229 = vrot.slane %v170, %v228
      %v231 = vmul.f32 %v224, %v229
      %v233 = vlaneseq
      %v234 = vshrl.u32 %v233, 7
      %v235 = vsub.s32 0, %v234
      %v236 = vrot.slane %v171, %v235
      %v238 = vadd.f32 %v231, %v236
      %v239 = vmul.f32 %v211, %v223
      %v241 = vlaneseq
      %v242 = vshrl.u32 %v241, 7
      %v243 = vsub.s32 0, %v242
      %v244 = vrot.slane %v172, %v243
      %v246 = vmul.f32 %v239, %v244
      %v248 = vlaneseq
      %v249 = vshrl.u32 %v248, 7
      %v250 = vsub.s32 0, %v249
      %v251 = vrot.slane %v173, %v250
      %v253 = vadd.f32 %v246, %v251
      %v254 = vpack.c.bf16 %v238, %v238
      %v255 = vpack.c.bf16 %v253, %v253
      %v264 = vunpack.c.l.b16 %v182
      %v265 = vunpack.c.l.b16 %v183
      %v266 = vunpack.c.l.b16 %v184
      %v267 = vunpack.c.l.b16 %v185
      %v268 = vunpack.c.l.b16 %v186
      %v269 = vunpack.c.l.b16 %v187
      %v270 = vunpack.c.l.b16 %v188
      %v271 = vunpack.c.l.b16 %v189
      %v272 = vpack.c.b16 %v265, %v264
      %v273 = vpack.c.b16 %v267, %v266
      %v274 = vpack.c.b16 %v269, %v268
      %v275 = vpack.c.b16 %v271, %v270
      %vm280 = vcmask 523264
      %v282 = vsel %vm280, %v255, 0
      %284 = vmatprep.subr.bf16.mxu0 0
      %285 = vmatpush1.bf16.msra.mxu0 %v272
      %286 = vmatprep.subr.bf16.mxu0 0
      %287 = vmatpush1.bf16.msra.mxu0 %v273
      %288 = vmatprep.subr.bf16.mxu0 0
      %289 = vmatpush1.bf16.msra.mxu0 %v274
      %290 = vmatprep.subr.bf16.mxu0 0
      %291 = vmatpush1.bf16.msra.mxu0 %v275
      %292 = vmatprep.subr.bf16.mxu0 0
      %293 = vmatpush1.bf16.msra.mxu0 0
      %294 = vmatprep.subr.bf16.mxu0 0
      %295 = vmatpush1.bf16.msra.mxu0 0
      %296 = vmatprep.subr.bf16.mxu0 0
      %297 = vmatpush1.bf16.msra.mxu0 0
      %298 = vmatprep.subr.bf16.mxu0 0
      %299 = vmatpush1.bf16.msra.mxu0 0
      %300 = vmatprep.subr.bf16.mxu0 0
      %301 = vmatpush1.bf16.msra.mxu0 0
      %302 = vmatprep.subr.bf16.mxu0 0
      %303 = vmatpush1.bf16.msra.mxu0 0
      %304 = vmatprep.subr.bf16.mxu0 0
      %305 = vmatpush1.bf16.msra.mxu0 0
      %306 = vmatprep.subr.bf16.mxu0 0
      %307 = vmatpush1.bf16.msra.mxu0 0
      %308 = vmatprep.subr.bf16.mxu0 0
      %309 = vmatpush1.bf16.msra.mxu0 0
      %310 = vmatprep.subr.bf16.mxu0 0
      %311 = vmatpush1.bf16.msra.mxu0 0
      %312 = vmatprep.subr.bf16.mxu0 0
      %313 = vmatpush1.bf16.msra.mxu0 0
      %314 = vmatprep.subr.bf16.mxu0 0
      %315 = vmatpush1.bf16.msra.mxu0 0
      %316 = vmatprep.mubr.bf16.mxu0 0
      %317 = vmatmul.mubr.bf16.gmra.mrb[0].mxu0 %v282
      %v318 = vpop.f32.mrb[0].mxu0
      %v319 = vadd.f32 0.0, %v318
      %v320 = vpop.f32.mrb[0].mxu0
      %v321 = vpop.f32.mrb[0].mxu0
      %v322 = vpop.f32.mrb[0].mxu0
      %323 = vdwg.mxu0
      %v332 = vunpack.c.l.b16 %v174
      %v333 = vunpack.c.l.b16 %v175
      %v334 = vunpack.c.l.b16 %v176
      %v335 = vunpack.c.l.b16 %v177
      %v336 = vunpack.c.l.b16 %v178
      %v337 = vunpack.c.l.b16 %v179
      %v338 = vunpack.c.l.b16 %v180
      %v339 = vunpack.c.l.b16 %v181
      %v340 = vpack.c.b16 %v333, %v332
      %v341 = vpack.c.b16 %v335, %v334
      %v342 = vpack.c.b16 %v337, %v336
      %v343 = vpack.c.b16 %v339, %v338
      %v349 = vsel %vm280, %v254, 0
      %351 = vmatprep.subr.bf16.mxu0 0
      %352 = vmatpush1.bf16.msra.mxu0 %v340
      %353 = vmatprep.subr.bf16.mxu0 0
      %354 = vmatpush1.bf16.msra.mxu0 %v341
      %355 = vmatprep.subr.bf16.mxu0 0
      %356 = vmatpush1.bf16.msra.mxu0 %v342
      %357 = vmatprep.subr.bf16.mxu0 0
      %358 = vmatpush1.bf16.msra.mxu0 %v343
      %359 = vmatprep.subr.bf16.mxu0 0
      %360 = vmatpush1.bf16.msra.mxu0 0
      %361 = vmatprep.subr.bf16.mxu0 0
      %362 = vmatpush1.bf16.msra.mxu0 0
      %363 = vmatprep.subr.bf16.mxu0 0
      %364 = vmatpush1.bf16.msra.mxu0 0
      %365 = vmatprep.subr.bf16.mxu0 0
      %366 = vmatpush1.bf16.msra.mxu0 0
      %367 = vmatprep.subr.bf16.mxu0 0
      %368 = vmatpush1.bf16.msra.mxu0 0
      %369 = vmatprep.subr.bf16.mxu0 0
      %370 = vmatpush1.bf16.msra.mxu0 0
      %371 = vmatprep.subr.bf16.mxu0 0
      %372 = vmatpush1.bf16.msra.mxu0 0
      %373 = vmatprep.subr.bf16.mxu0 0
      %374 = vmatpush1.bf16.msra.mxu0 0
      %375 = vmatprep.subr.bf16.mxu0 0
      %376 = vmatpush1.bf16.msra.mxu0 0
      %377 = vmatprep.subr.bf16.mxu0 0
      %378 = vmatpush1.bf16.msra.mxu0 0
      %379 = vmatprep.subr.bf16.mxu0 0
      %380 = vmatpush1.bf16.msra.mxu0 0
      %381 = vmatprep.subr.bf16.mxu0 0
      %382 = vmatpush1.bf16.msra.mxu0 0
      %383 = vmatprep.mubr.bf16.mxu0 0
      %384 = vmatmul.mubr.bf16.gmra.mrb[0].mxu0 %v349
      %v385 = vpop.f32.mrb[0].mxu0
      %v386 = vadd.f32 %v319, %v385
      %v387 = vpop.f32.mrb[0].mxu0
      %v388 = vpop.f32.mrb[0].mxu0
      %v389 = vpop.f32.mrb[0].mxu0
      %390 = vdwg.mxu0
      %s391 = scalar_lea.vmem [#allocation4], %s196
      %392 = vst.msk [vmem:[%s391] sm:$0xf] %vm201, %v386
    $region120: #{patch_merging.1} parent=1 // loop_footer
      %s195 = sadd.s32 1, %s191
    $region121: #{patch_merging.1} parent=1 // loop_footer_branch
      %190 = sbr.rel target = $region117
    $region122: #{patch_merging.1} parent=1 // loop_exit
      _
    // Predicated region
    $region123: #{patch_merging.1} parent=1 // pred_check
      _
    $region124: #{patch_merging.1} parent=1 // pred_check_branch
      %394 = sbr.rel (0) target = $region126
    $region125: #{patch_merging.1} parent=1 // pred_region
      %s396 = ssub.s32 512, 512
      %397 = vsyncadd [#allocation5], %s396
      %s398 = sshll.u32 [#allocation4], 4
      %s399 = int_to_ptr.vmem [resolvable:$true] %s398
      %404 = dma.vmem_to_hbm [thread:$0]  %s399, 512, %s8, [#allocation5], 64, 64, 4
    $region126: #{patch_merging.1} parent=1 // pred_fallthru
      _
    // Predicated region
    $region127: #{patch_merging.1} parent=1 // pred_check
      _
    $region128: #{patch_merging.1} parent=1 // pred_check_branch
      %406 = sbr.rel (0) target = $region130
    $region129: #{patch_merging.1} parent=1 // pred_region
      %407 = dma.done [#allocation5], 512
    $region130: #{patch_merging.1} parent=1 // pred_fallthru
      _
    %408 = vsyncpa [#allocation5], 1

</llo_original>
